<compile_context>
chip_gen: v7x
topology: tpu7x:2x2x1
jax: 0.10.0
libtpu: 0.0.40
codegen_flags: <defaults>
</compile_context>

<pallas_src>
import jax
import jax.numpy as jnp
from jax.experimental import pallas as pl
from jax.experimental.pallas import tpu as pltpu


def _make_kernel(layer_dims):
    """layer_dims: static tuple of (in_dim, out_dim) per layer."""
    n_layers = len(layer_dims)

    def kernel(x_ref, w_ref, b_ref, o_ref):
        # x_ref: [Bt, in0]        (batch on sublanes, only for the input tile)
        # w_ref: [L, P, P]        zero-padded PyTorch-layout weights (out, in)
        # b_ref: [L, P, 1]        zero-padded biases, f32
        # o_ref: [out_last, Bt]   lane-dense output slab
        in0, out0 = layer_dims[0]
        w0 = w_ref[0, :out0, :in0]
        # fc1: contract both operands on their last axis (A @ B.T). This keeps x
        # untransposed in HBM; the in-kernel transpose rides the XLU slot.
        h = jax.lax.dot_general(
            w0, x_ref[...].astype(w0.dtype),
            dimension_numbers=(((1,), (1,)), ((), ())),
            preferred_element_type=jnp.float32)                 # [out0, Bt] f32
        h = jnp.maximum(h + b_ref[0, :out0, :], 0.0)

        for l in range(1, n_layers):
            in_d, out_d = layer_dims[l]
            w = w_ref[l, :out_d, :in_d]
            h = jnp.dot(w, h.astype(w.dtype),
                        preferred_element_type=jnp.float32)     # [out_d, Bt] f32
            h = h + b_ref[l, :out_d, :]
            if l < n_layers - 1:
                h = jnp.maximum(h, 0.0)

        o_ref[...] = h.astype(o_ref.dtype)

    return kernel


def _pick_batch_tile(B, max_tile=2048):
    """Prefer exactly 2 grid steps (one per v7x TC), else 1, tile a multiple of 128."""
    half = B // 2
    if half % 128 == 0 and half <= max_tile:
        return half
    if B % 128 == 0 and B <= max_tile:
        return B
    bt = (min(max_tile, B) // 128) * 128
    while bt >= 128:
        if B % bt == 0:
            return bt
        bt -= 128
    raise ValueError(f"batch={B} must be a multiple of 128")


def mlp_forward(x, params, *, batch_tile=None, mxu_dtype=jnp.float32):
    """x: [B, n_input].  params: [(w, b)] in PyTorch layout (w: [out, in], b: [out]).

    Returns [B, 1] -- same math as Net.forward.  mxu_dtype=jnp.bfloat16 is only
    worth it when B is large AND x is already bf16 upstream (it halves x's HBM
    bytes); at harness sizes f32 end-to-end is the right default on all chips.
    """
    B, n_in = x.shape
    layer_dims = tuple((w.shape[1], w.shape[0]) for w, _ in params)
    assert layer_dims[0][0] == n_in
    for (_, o_prev), (i_next, _) in zip(layer_dims[:-1], layer_dims[1:]):
        assert o_prev == i_next
    n_out = layer_dims[-1][1]
    n_layers = len(params)

    if batch_tile is None:
        batch_tile = _pick_batch_tile(B)
    assert B % batch_tile == 0, "batch must be divisible by batch_tile"
    assert batch_tile % 128 == 0, "batch_tile must be a multiple of 128 (lane width)"

    # Pack all weights / biases into one operand each (zero-padded stacks).
    P = max(max(i, o) for i, o in layer_dims)
    w_pack = jnp.zeros((n_layers, P, P), mxu_dtype)
    b_pack = jnp.zeros((n_layers, P, 1), jnp.float32)
    for l, (w, b) in enumerate(params):
        w_pack = w_pack.at[l, : w.shape[0], : w.shape[1]].set(w.astype(mxu_dtype))
        b_pack = b_pack.at[l, : b.shape[0], 0].set(b.astype(jnp.float32))

    itemsize = jnp.dtype(mxu_dtype).itemsize
    flops = 2 * B * sum(i * o for i, o in layer_dims)
    bytes_accessed = (B * n_in * itemsize
                      + w_pack.size * itemsize + b_pack.size * 4
                      + B * n_out * x.dtype.itemsize)

    y_t = pl.pallas_call(
        _make_kernel(layer_dims),
        out_shape=jax.ShapeDtypeStruct((n_out, B), x.dtype),
        grid_spec=pltpu.PrefetchScalarGridSpec(
            num_scalar_prefetch=0,
            grid=(B // batch_tile,),          # 2 parallel steps -> both v7x TCs busy
            in_specs=[
                # x tile straight from HBM, no wrapper transpose.
                pl.BlockSpec((batch_tile, n_in), lambda i: (i, 0)),
                # Packed weights / biases: full-array blocks, constant index_map
                # -> VMEM resident for the whole grid, single DMA slot each.
                pl.BlockSpec((n_layers, P, P), lambda i: (0, 0, 0)),
                pl.BlockSpec((n_layers, P, 1), lambda i: (0, 0, 0)),
            ],
            out_specs=pl.BlockSpec((n_out, batch_tile), lambda i: (0, i)),
        ),
        compiler_params=pltpu.CompilerParams(
            dimension_semantics=("parallel",)),
        cost_estimate=pl.CostEstimate(flops=flops, transcendentals=0,
                                      bytes_accessed=bytes_accessed),
    )(x.astype(mxu_dtype), w_pack, b_pack)

    if n_out == 1:
        # [1, B] -> [B, 1] is a pure row-major reshape (no data movement).
        return y_t.reshape(B, 1)
    return y_t.T


def init_params(key, n_input, n_hidden):
    """nn.Linear-style init: W, b ~ U(-1/sqrt(fan_in), 1/sqrt(fan_in)); W is [out, in]."""
    n_half = n_hidden // 2
    dims = [(n_input, n_hidden),
            (n_hidden, n_half),
            (n_half, n_half),
            (n_half, n_half),
            (n_half, 1)]
    params = []
    for fan_in, fan_out in dims:
        key, kw, kb = jax.random.split(key, 3)
        bound = 1.0 / float(fan_in) ** 0.5
        w = jax.random.uniform(kw, (fan_out, fan_in), jnp.float32, -bound, bound)
        b = jax.random.uniform(kb, (fan_out,), jnp.float32, -bound, bound)
        params.append((w, b))
    return params


def reference_forward(x, params):
    h = x
    for i, (w, b) in enumerate(params):
        h = h @ w.T + b
        if i < len(params) - 1:
            h = jnp.maximum(h, 0.0)
    return h


if __name__ == "__main__":
    key = jax.random.PRNGKey(0)
    B, n_input, n_hidden = 512, 32, 32   # auto batch_tile=256 -> grid of 2 parallel steps

    kx, kp = jax.random.split(key)
    x = jax.random.normal(kx, (B, n_input), jnp.float32)
    params = init_params(kp, n_input, n_hidden)

    ref = reference_forward(x, params)

    # f32 MXU operands (default): tight correctness check vs pure-JAX reference.
    out = jax.block_until_ready(mlp_forward(x, params))
    assert out.shape == (B, 1), out.shape
    assert jnp.allclose(out, ref, atol=1e-4, rtol=1e-4), "f32 mismatch vs reference"

    # bf16 MXU operands (x-bandwidth option for large batches), f32 accumulation:
    # activations are re-quantized between layers, so use a loose tolerance.
    out_bf16 = jax.block_until_ready(
        mlp_forward(x, params, mxu_dtype=jnp.bfloat16))
    assert jnp.allclose(out_bf16, ref, atol=1e-1, rtol=1e-1), "bf16 mismatch vs reference"

    print("KERNEL_OK")
</pallas_src>

<mosaic_0001>
module attributes {stable_mosaic.version = 11 : i64} {
  func.func @kernel(%arg0: i32, %arg1: memref<256x32xf32, #tpu.memory_space<vmem>>, %arg2: memref<5x32x32xf32, #tpu.memory_space<vmem>>, %arg3: memref<5x32x1xf32, #tpu.memory_space<vmem>>, %arg4: memref<1x256xf32, #tpu.memory_space<vmem>>) attributes {dimension_semantics = [#tpu.dimension_semantics<parallel>], iteration_bounds = array<i64: 2>, scalar_prefetch = 0 : i64, scratch_operands = 0 : i64, tpu.core_type = #tpu.core_type<tc>, window_params = [{transform_indices = @transform_0, window_bounds = array<i64: 256, 32>}, {pipeline_mode = #tpu.pipeline_mode<synchronous>, transform_indices = @transform_1, window_bounds = array<i64: 5, 32, 32>}, {pipeline_mode = #tpu.pipeline_mode<synchronous>, transform_indices = @transform_2, window_bounds = array<i64: 5, 32, 1>}, {transform_indices = @transform_3, window_bounds = array<i64: 1, 256>}]} {
    %c0 = arith.constant 0 : index
    %c0_0 = arith.constant 0 : index
    %c0_1 = arith.constant 0 : index
    %0 = vector.load %arg2[%c0, %c0_0, %c0_1] : memref<5x32x32xf32, #tpu.memory_space<vmem>>, vector<1x32x32xf32>
    %1 = vector.shape_cast %0 : vector<1x32x32xf32> to vector<32x32xf32>
    %c0_2 = arith.constant 0 : index
    %c0_3 = arith.constant 0 : index
    %2 = vector.load %arg1[%c0_2, %c0_3] : memref<256x32xf32, #tpu.memory_space<vmem>>, vector<256x32xf32>
    %cst = arith.constant dense<0.000000e+00> : vector<32x256xf32>
    %3 = tpu.matmul %1, %2, %cst {dimension_numbers = #tpu.dot_dimension_numbers<[1], [1], [0], [0], [0, 0, 1, 0], [], []>} : vector<32x32xf32>, vector<256x32xf32>, vector<32x256xf32> -> vector<32x256xf32>
    %c0_4 = arith.constant 0 : index
    %c0_5 = arith.constant 0 : index
    %c0_6 = arith.constant 0 : index
    %4 = vector.load %arg3[%c0_4, %c0_5, %c0_6] : memref<5x32x1xf32, #tpu.memory_space<vmem>>, vector<1x32x1xf32>
    %5 = vector.shape_cast %4 : vector<1x32x1xf32> to vector<32x1xf32>
    %6 = vector.broadcast %5 : vector<32x1xf32> to vector<32x256xf32>
    %7 = arith.addf %3, %6 : vector<32x256xf32>
    %cst_7 = arith.constant 0.000000e+00 : f32
    %8 = vector.broadcast %cst_7 : f32 to vector<32x256xf32>
    %9 = arith.maximumf %7, %8 : vector<32x256xf32>
    %c1 = arith.constant 1 : index
    %c0_8 = arith.constant 0 : index
    %c0_9 = arith.constant 0 : index
    %10 = vector.load %arg2[%c1, %c0_8, %c0_9] : memref<5x32x32xf32, #tpu.memory_space<vmem>>, vector<1x16x32xf32>
    %11 = vector.shape_cast %10 : vector<1x16x32xf32> to vector<16x32xf32>
    %cst_10 = arith.constant dense<0.000000e+00> : vector<16x256xf32>
    %12 = tpu.matmul %11, %9, %cst_10 {dimension_numbers = #tpu.dot_dimension_numbers<[1], [0], [0], [1], [0, 0, 1, 1], [], []>} : vector<16x32xf32>, vector<32x256xf32>, vector<16x256xf32> -> vector<16x256xf32>
    %c1_11 = arith.constant 1 : index
    %c0_12 = arith.constant 0 : index
    %c0_13 = arith.constant 0 : index
    %13 = vector.load %arg3[%c1_11, %c0_12, %c0_13] : memref<5x32x1xf32, #tpu.memory_space<vmem>>, vector<1x16x1xf32>
    %14 = vector.shape_cast %13 : vector<1x16x1xf32> to vector<16x1xf32>
    %15 = vector.broadcast %14 : vector<16x1xf32> to vector<16x256xf32>
    %16 = arith.addf %12, %15 : vector<16x256xf32>
    %cst_14 = arith.constant 0.000000e+00 : f32
    %17 = vector.broadcast %cst_14 : f32 to vector<16x256xf32>
    %18 = arith.maximumf %16, %17 : vector<16x256xf32>
    %c2 = arith.constant 2 : index
    %c0_15 = arith.constant 0 : index
    %c0_16 = arith.constant 0 : index
    %19 = vector.load %arg2[%c2, %c0_15, %c0_16] : memref<5x32x32xf32, #tpu.memory_space<vmem>>, vector<1x16x16xf32>
    %20 = vector.shape_cast %19 : vector<1x16x16xf32> to vector<16x16xf32>
    %cst_17 = arith.constant dense<0.000000e+00> : vector<16x256xf32>
    %21 = tpu.matmul %20, %18, %cst_17 {dimension_numbers = #tpu.dot_dimension_numbers<[1], [0], [0], [1], [0, 0, 1, 1], [], []>} : vector<16x16xf32>, vector<16x256xf32>, vector<16x256xf32> -> vector<16x256xf32>
    %c2_18 = arith.constant 2 : index
    %c0_19 = arith.constant 0 : index
    %c0_20 = arith.constant 0 : index
    %22 = vector.load %arg3[%c2_18, %c0_19, %c0_20] : memref<5x32x1xf32, #tpu.memory_space<vmem>>, vector<1x16x1xf32>
    %23 = vector.shape_cast %22 : vector<1x16x1xf32> to vector<16x1xf32>
    %24 = vector.broadcast %23 : vector<16x1xf32> to vector<16x256xf32>
    %25 = arith.addf %21, %24 : vector<16x256xf32>
    %cst_21 = arith.constant 0.000000e+00 : f32
    %26 = vector.broadcast %cst_21 : f32 to vector<16x256xf32>
    %27 = arith.maximumf %25, %26 : vector<16x256xf32>
    %c3 = arith.constant 3 : index
    %c0_22 = arith.constant 0 : index
    %c0_23 = arith.constant 0 : index
    %28 = vector.load %arg2[%c3, %c0_22, %c0_23] : memref<5x32x32xf32, #tpu.memory_space<vmem>>, vector<1x16x16xf32>
    %29 = vector.shape_cast %28 : vector<1x16x16xf32> to vector<16x16xf32>
    %cst_24 = arith.constant dense<0.000000e+00> : vector<16x256xf32>
    %30 = tpu.matmul %29, %27, %cst_24 {dimension_numbers = #tpu.dot_dimension_numbers<[1], [0], [0], [1], [0, 0, 1, 1], [], []>} : vector<16x16xf32>, vector<16x256xf32>, vector<16x256xf32> -> vector<16x256xf32>
    %c3_25 = arith.constant 3 : index
    %c0_26 = arith.constant 0 : index
    %c0_27 = arith.constant 0 : index
    %31 = vector.load %arg3[%c3_25, %c0_26, %c0_27] : memref<5x32x1xf32, #tpu.memory_space<vmem>>, vector<1x16x1xf32>
    %32 = vector.shape_cast %31 : vector<1x16x1xf32> to vector<16x1xf32>
    %33 = vector.broadcast %32 : vector<16x1xf32> to vector<16x256xf32>
    %34 = arith.addf %30, %33 : vector<16x256xf32>
    %cst_28 = arith.constant 0.000000e+00 : f32
    %35 = vector.broadcast %cst_28 : f32 to vector<16x256xf32>
    %36 = arith.maximumf %34, %35 : vector<16x256xf32>
    %c4 = arith.constant 4 : index
    %c0_29 = arith.constant 0 : index
    %c0_30 = arith.constant 0 : index
    %37 = vector.load %arg2[%c4, %c0_29, %c0_30] : memref<5x32x32xf32, #tpu.memory_space<vmem>>, vector<1x1x16xf32>
    %38 = vector.shape_cast %37 : vector<1x1x16xf32> to vector<1x16xf32>
    %cst_31 = arith.constant dense<0.000000e+00> : vector<1x256xf32>
    %39 = tpu.matmul %38, %36, %cst_31 {dimension_numbers = #tpu.dot_dimension_numbers<[1], [0], [0], [1], [0, 0, 1, 1], [], []>} : vector<1x16xf32>, vector<16x256xf32>, vector<1x256xf32> -> vector<1x256xf32>
    %c4_32 = arith.constant 4 : index
    %c0_33 = arith.constant 0 : index
    %c0_34 = arith.constant 0 : index
    %40 = vector.load %arg3[%c4_32, %c0_33, %c0_34] : memref<5x32x1xf32, #tpu.memory_space<vmem>>, vector<1x1x1xf32>
    %41 = vector.shape_cast %40 : vector<1x1x1xf32> to vector<1x1xf32>
    %42 = vector.broadcast %41 : vector<1x1xf32> to vector<1x256xf32>
    %43 = arith.addf %39, %42 : vector<1x256xf32>
    %c0_35 = arith.constant 0 : index
    %c0_36 = arith.constant 0 : index
    %44 = vector.load %arg4[%c0_35, %c0_36] : memref<1x256xf32, #tpu.memory_space<vmem>>, vector<1x256xf32>
    tpu.vector_store %arg4[%c0_35, %c0_36], %43 {strides = array<i32>} : memref<1x256xf32, #tpu.memory_space<vmem>>, vector<1x256xf32>,
    return
  }
  func.func @transform_0(%arg0: i32) -> (i32, i32) {
    %c0_i32 = arith.constant 0 : i32
    %c0_i32_0 = arith.constant 0 : i32
    return %arg0, %c0_i32 : i32, i32
  }
  func.func @transform_1(%arg0: i32) -> (i32, i32, i32) {
    %c0_i32 = arith.constant 0 : i32
    %c0_i32_0 = arith.constant 0 : i32
    %c0_i32_1 = arith.constant 0 : i32
    %c0_i32_2 = arith.constant 0 : i32
    return %c0_i32, %c0_i32_0, %c0_i32_1 : i32, i32, i32
  }
  func.func @transform_2(%arg0: i32) -> (i32, i32, i32) {
    %c0_i32 = arith.constant 0 : i32
    %c0_i32_0 = arith.constant 0 : i32
    %c0_i32_1 = arith.constant 0 : i32
    %c0_i32_2 = arith.constant 0 : i32
    return %c0_i32, %c0_i32_0, %c0_i32_1 : i32, i32, i32
  }
  func.func @transform_3(%arg0: i32) -> (i32, i32) {
    %c0_i32 = arith.constant 0 : i32
    %c0_i32_0 = arith.constant 0 : i32
    return %c0_i32, %arg0 : i32, i32
  }
}

</mosaic_0001>

<llo_original>
// kernel: tpu_custom_call.1
$region0: #{tpu_custom_call.1}
  #allocation0 [shape = 'u32[]', space=smem, size = 0x4, offset = 0x4, fixed_abs, tag = 'smem constant byte address 0x4 - core index']
  #allocation1 [shape = 'u32[144,128]{1,0:T(1,128)}', space=vmem, size = 0x12000, scoped, tag = 'internal scratch']
  %s0 = inlined_call_operand.vmem [shape: f32[512,32], index: 0, kind: input, shape index: {}]
  %s1 = inlined_call_operand.vmem [shape: f32[5,32,32], index: 1, kind: input, shape index: {}]
  %s2 = inlined_call_operand.vmem [shape: f32[5,32,1], index: 2, kind: input, shape index: {}]
  %s3 = inlined_call_operand.hbm [shape: f32[1,512], index: 3, kind: output, shape index: {}]
  %s4 = sld [smem:[#allocation0]]
  $region45: #{tpu_custom_call.1} parent=0
    _
  %s6 = ssub.s32 1, %s4
  %s7 = scalar_select 0, %s6, %s4
  $region1: #{tpu_custom_call.1} parent=0
    #allocation2 [shape = 'u8[2048]{0}', space=vmem, size = 0x800, scoped, tag = 'output window, operand 0']
    #allocation3 [shape = 's32[2]{0}', space=sflag, size = 0x8, scoped, tag = 'scoped memory for tpu_custom_call.1']
    %8 = vsyncpa [#allocation3], 0
    %s9 = scalar_lea.sflag [#allocation3], 1
    %10 = vsyncpa %s9, 0
    loop: start=0, step=1, limit=4
    $region2: #{tpu_custom_call.1} parent=1 // loop_pre_header
      _
    $region3: #{tpu_custom_call.1} parent=1 // loop_header
      %s12 = sphi 0, %s16
      %p13 = scmp.ge.s32.totalorder %s12, 4
      %s22 = sphi 0, %s24
      %s25 = sphi 0, %s22
      %s26 = sphi 0, %s25
      %s42 = sphi 0, %s26
      %s46 = sphi 0, %s46
      %s48 = sphi 0, %s46
      %s49 = sphi 0, %s48
      %s63 = sphi 0, %s49
      %s67 = sphi 0, %s67
      %s69 = sphi 0, %s67
      %s70 = sphi 0, %s69
      %s84 = sphi 0, %s70
      %s90 = sphi 0, %s92
      %s93 = sphi 0, %s90
      %s94 = sphi 0, %s93
      %s110 = sphi 0, %s94
    $region4: #{tpu_custom_call.1} parent=1 // loop_header_branch
      %15 = sbr.rel (%p13) target = $region8
    $region5: #{tpu_custom_call.1} parent=1 // loop_body
      %s17 = ssub.s32 %s12, 1
      %s18 = ssub.s32 %s12, 2
      %s19 = sadd.s32 %s12, 1
      %s20 = ssub.s32 %s12, %s19
      %p21 = scmp.eq.s32.totalorder %s20, 0
      %s23 = sadd.s32 %s22, 1
      %s24 = scalar_select %p21, %s22, %s23
      %p27 = pneg %p21
      %p28 = scmp.eq.s32.totalorder %s12, 1
      %p29 = por %p27, %p28
      %p30 = scmp.ne.s32.totalorder %s22, %s25
      %p31 = scmp.eq.s32.totalorder %s12, 0
      %p32 = por %p30, %p31
      %p33 = scmp.ne.s32.totalorder %s22, %s25
      %p34 = scmp.eq.s32.totalorder %s17, 1
      %p35 = por %p33, %p34
      %p36 = scmp.ne.s32.totalorder %s25, %s26
      %p37 = scmp.eq.s32.totalorder %s17, 0
      %p38 = por %p36, %p37
      %p39 = scmp.ne.s32.totalorder %s25, %s26
      %p40 = scmp.eq.s32.totalorder %s18, 1
      %p41 = por %p39, %p40
      %p43 = scmp.ne.s32.totalorder %s26, %s42
      %p44 = scmp.eq.s32.totalorder %s18, 0
      %p45 = por %p43, %p44
      %s47 = sadd.s32 %s46, 1
      %p50 = scmp.eq.s32.totalorder %s12, 1
      %p51 = scmp.ne.s32.totalorder %s46, %s48
      %p52 = scmp.eq.s32.totalorder %s12, 0
      %p53 = por %p51, %p52
      %p54 = scmp.ne.s32.totalorder %s46, %s48
      %p55 = scmp.eq.s32.totalorder %s17, 1
      %p56 = por %p54, %p55
      %p57 = scmp.ne.s32.totalorder %s48, %s49
      %p58 = scmp.eq.s32.totalorder %s17, 0
      %p59 = por %p57, %p58
      %p60 = scmp.ne.s32.totalorder %s48, %s49
      %p61 = scmp.eq.s32.totalorder %s18, 1
      %p62 = por %p60, %p61
      %p64 = scmp.ne.s32.totalorder %s49, %s63
      %p65 = scmp.eq.s32.totalorder %s18, 0
      %p66 = por %p64, %p65
      %s68 = sadd.s32 %s67, 1
      %p71 = scmp.eq.s32.totalorder %s12, 1
      %p72 = scmp.ne.s32.totalorder %s67, %s69
      %p73 = scmp.eq.s32.totalorder %s12, 0
      %p74 = por %p72, %p73
      %p75 = scmp.ne.s32.totalorder %s67, %s69
      %p76 = scmp.eq.s32.totalorder %s17, 1
      %p77 = por %p75, %p76
      %p78 = scmp.ne.s32.totalorder %s69, %s70
      %p79 = scmp.eq.s32.totalorder %s17, 0
      %p80 = por %p78, %p79
      %p81 = scmp.ne.s32.totalorder %s69, %s70
      %p82 = scmp.eq.s32.totalorder %s18, 1
      %p83 = por %p81, %p82
      %p85 = scmp.ne.s32.totalorder %s70, %s84
      %p86 = scmp.eq.s32.totalorder %s18, 0
      %p87 = por %p85, %p86
      %s88 = ssub.s32 %s12, %s19
      %p89 = scmp.eq.s32.totalorder %s88, 0
      %s91 = sadd.s32 %s90, 1
      %s92 = scalar_select %p89, %s90, %s91
      %p95 = pneg %p89
      %p96 = scmp.eq.s32.totalorder %s12, 1
      %p97 = por %p95, %p96
      %p98 = scmp.ne.s32.totalorder %s90, %s93
      %p99 = scmp.eq.s32.totalorder %s12, 0
      %p100 = por %p98, %p99
      %p101 = scmp.ne.s32.totalorder %s90, %s93
      %p102 = scmp.eq.s32.totalorder %s17, 1
      %p103 = por %p101, %p102
      %p104 = scmp.ne.s32.totalorder %s93, %s94
      %p105 = scmp.eq.s32.totalorder %s17, 0
      %p106 = por %p104, %p105
      %p107 = scmp.ne.s32.totalorder %s93, %s94
      %p108 = scmp.eq.s32.totalorder %s18, 1
      %p109 = por %p107, %p108
      %p111 = scmp.ne.s32.totalorder %s94, %s110
      %p112 = scmp.eq.s32.totalorder %s18, 0
      %p113 = por %p111, %p112
      %p114 = scmp.le.s32.totalorder 1, %s12
      %p115 = scmp.lt.s32.totalorder %s12, 3
      %p116 = pnand %p114, %p115
      %p117 = pneg %p116
      // Predicated region
      $region9: #{tpu_custom_call.1} parent=5 // pred_check
        _
      $region10: #{tpu_custom_call.1} parent=5 // pred_check_branch
        %119 = sbr.rel (%p116) target = $region12
      $region11: #{tpu_custom_call.1} parent=5 // pred_region
        %s120 = ssub.s32 %s12, 1
        // Predicated region
        $region13: #{tpu_custom_call.1} parent=11 // pred_check
          %p121 = pneg %p59
        $region14: #{tpu_custom_call.1} parent=11 // pred_check_branch
          %123 = sbr.rel (%p121) target = $region16
        $region15: #{tpu_custom_call.1} parent=11 // pred_region
          _
        $region16: #{tpu_custom_call.1} parent=11 // pred_fallthru
          _
        // Predicated region
        $region17: #{tpu_custom_call.1} parent=11 // pred_check
          %p124 = pneg %p80
        $region18: #{tpu_custom_call.1} parent=11 // pred_check_branch
          %126 = sbr.rel (%p124) target = $region20
        $region19: #{tpu_custom_call.1} parent=11 // pred_region
          _
        $region20: #{tpu_custom_call.1} parent=11 // pred_fallthru
          _
      $region12: #{tpu_custom_call.1} parent=5 // pred_fallthru
        _
      %p127 = scmp.lt.s32.totalorder %s12, 2
      // Predicated region
      $region21: #{tpu_custom_call.1} parent=5 // pred_check
        %p128 = pneg %p127
      $region22: #{tpu_custom_call.1} parent=5 // pred_check_branch
        %130 = sbr.rel (%p128) target = $region24
      $region23: #{tpu_custom_call.1} parent=5 // pred_region
        // Predicated region
        $region25: #{tpu_custom_call.1} parent=23 // pred_check
          %p131 = pneg %p32
        $region26: #{tpu_custom_call.1} parent=23 // pred_check_branch
          %133 = sbr.rel (%p131) target = $region28
        $region27: #{tpu_custom_call.1} parent=23 // pred_region
          %s134 = smul.u32 32, %s12
          %p135 = scmp.lt.s32.totalorder %s134, 63
          %s136 = scalar_select %p135, %s134, 63
          %s137 = smul.addr %s136, 8
          %s138 = scalar_lea.vmem %s0, %s137
          %s139 = smul.u32 32, %s12
        $region28: #{tpu_custom_call.1} parent=23 // pred_fallthru
          _
      $region24: #{tpu_custom_call.1} parent=5 // pred_fallthru
        _
      %p140 = scmp.le.s32.totalorder 1, %s12
      %p141 = scmp.lt.s32.totalorder %s12, 3
      %p142 = pnand %p140, %p141
      %p143 = pneg %p142
      // Predicated region
      $region29: #{tpu_custom_call.1} parent=5 // pred_check
        _
      $region30: #{tpu_custom_call.1} parent=5 // pred_check_branch
        %145 = sbr.rel (%p142) target = $region32
      $region31: #{tpu_custom_call.1} parent=5 // pred_region
        %s146 = ssub.s32 %s12, 1
        %s147 = smul.u32 32, %s17
        %p148 = scmp.lt.s32.totalorder %s147, 63
        %s149 = scalar_select %p148, %s147, 63
        %s150 = smul.addr %s149, 8
        %s151 = scalar_lea.vmem %s0, %s150
        %p152 = pneg %p38
        %p153 = pneg %p35
        %p154 = pneg %p59
        %p155 = pneg %p56
        %p156 = pneg %p80
        %p157 = pneg %p77
        %p158 = pneg %p106
        %p159 = pneg %p103
        %s160 = sand.u32 %s93, 1
        %s161 = scalar_lea.sflag [#allocation3], %s160
        %s162 = sand.u32 %s93, 1
        %s163 = smul.addr %s162, 2
        %s164 = scalar_lea.vmem [#allocation2], %s163
        %s165 = smul.u32 32, %s17
        %p166 = scmp.lt.s32.totalorder %s165, 63
        %s167 = scalar_select %p166, %s165, 63
        %s168 = smul.addr %s167, 8
        %s169 = scalar_lea.vmem %s0, %s168
        %s170 = smul.u32 32, %s17
        %s171 = smul.u32 2, %s17
        %v172 = vld [vmem:[%s1] sm:$0xff]
        %v173 = vld [vmem:[%s1 + $0x8] sm:$0xff]
        %v174 = vld [vmem:[%s1 + $0x10] sm:$0xff]
        %v175 = vld [vmem:[%s1 + $0x18] sm:$0xff]
        %v176 = vld [vmem:[%s169] sm:$0xff]
        %v177 = vld [vmem:[%s169 + $0x8] sm:$0xff]
        %v178 = vld [vmem:[%s169 + $0x10] sm:$0xff]
        %v179 = vld [vmem:[%s169 + $0x18] sm:$0xff]
        %v180 = vld [vmem:[%s169 + $0x20] sm:$0xff]
        %v181 = vld [vmem:[%s169 + $0x28] sm:$0xff]
        %v182 = vld [vmem:[%s169 + $0x30] sm:$0xff]
        %v183 = vld [vmem:[%s169 + $0x38] sm:$0xff]
        %v184 = vld [vmem:[%s169 + $0x40] sm:$0xff]
        %v185 = vld [vmem:[%s169 + $0x48] sm:$0xff]
        %v186 = vld [vmem:[%s169 + $0x50] sm:$0xff]
        %v187 = vld [vmem:[%s169 + $0x58] sm:$0xff]
        %v188 = vld [vmem:[%s169 + $0x60] sm:$0xff]
        %v189 = vld [vmem:[%s169 + $0x68] sm:$0xff]
        %v190 = vld [vmem:[%s169 + $0x70] sm:$0xff]
        %v191 = vld [vmem:[%s169 + $0x78] sm:$0xff]
        %v192 = vld [vmem:[%s169 + $0x80] sm:$0xff]
        %v193 = vld [vmem:[%s169 + $0x88] sm:$0xff]
        %v194 = vld [vmem:[%s169 + $0x90] sm:$0xff]
        %v195 = vld [vmem:[%s169 + $0x98] sm:$0xff]
        %v196 = vld [vmem:[%s169 + $0xa0] sm:$0xff]
        %v197 = vld [vmem:[%s169 + $0xa8] sm:$0xff]
        %v198 = vld [vmem:[%s169 + $0xb0] sm:$0xff]
        %v199 = vld [vmem:[%s169 + $0xb8] sm:$0xff]
        %v200 = vld [vmem:[%s169 + $0xc0] sm:$0xff]
        %v201 = vld [vmem:[%s169 + $0xc8] sm:$0xff]
        %v202 = vld [vmem:[%s169 + $0xd0] sm:$0xff]
        %v203 = vld [vmem:[%s169 + $0xd8] sm:$0xff]
        %v204 = vld [vmem:[%s169 + $0xe0] sm:$0xff]
        %v205 = vld [vmem:[%s169 + $0xe8] sm:$0xff]
        %v206 = vld [vmem:[%s169 + $0xf0] sm:$0xff]
        %v207 = vld [vmem:[%s169 + $0xf8] sm:$0xff]
        %v208 = vld [vmem:[%s2] sm:$0xff]
        %v209 = vld [vmem:[%s2 + $0x8] sm:$0xff]
        %v210 = vld [vmem:[%s2 + $0x10] sm:$0xff]
        %v211 = vld [vmem:[%s2 + $0x18] sm:$0xff]
        %213 = vset.pattern.permute.xlu0 0
        %214 = vperm.xlu0 %213, %v208
        %v215 = vpop.permute.xlu0 %214
        %218 = vset.pattern.permute.xlu0 0
        %219 = vperm.xlu0 %218, %v209
        %v220 = vpop.permute.xlu0 %219
        %223 = vset.pattern.permute.xlu0 0
        %224 = vperm.xlu0 %223, %v210
        %v225 = vpop.permute.xlu0 %224
        %228 = vset.pattern.permute.xlu0 0
        %229 = vperm.xlu0 %228, %v211
        %v230 = vpop.permute.xlu0 %229
        %vm232 = vcmask 261120
        %v234 = vsel %vm232, %v172, 0
        %v237 = vsel %vm232, %v173, 0
        %v240 = vsel %vm232, %v174, 0
        %v243 = vsel %vm232, %v175, 0
        %v246 = vsel %vm232, %v176, 0
        %v249 = vsel %vm232, %v177, 0
        %v252 = vsel %vm232, %v178, 0
        %v255 = vsel %vm232, %v179, 0
        %v258 = vsel %vm232, %v180, 0
        %v261 = vsel %vm232, %v181, 0
        %v264 = vsel %vm232, %v182, 0
        %v267 = vsel %vm232, %v183, 0
        %v270 = vsel %vm232, %v184, 0
        %v273 = vsel %vm232, %v185, 0
        %v276 = vsel %vm232, %v186, 0
        %v279 = vsel %vm232, %v187, 0
        %v282 = vsel %vm232, %v188, 0
        %v285 = vsel %vm232, %v189, 0
        %v288 = vsel %vm232, %v190, 0
        %v291 = vsel %vm232, %v191, 0
        %v294 = vsel %vm232, %v192, 0
        %v297 = vsel %vm232, %v193, 0
        %v300 = vsel %vm232, %v194, 0
        %v303 = vsel %vm232, %v195, 0
        %v306 = vsel %vm232, %v196, 0
        %v309 = vsel %vm232, %v197, 0
        %v312 = vsel %vm232, %v198, 0
        %v315 = vsel %vm232, %v199, 0
        %v318 = vsel %vm232, %v200, 0
        %v321 = vsel %vm232, %v201, 0
        %v324 = vsel %vm232, %v202, 0
        %v327 = vsel %vm232, %v203, 0
        %v330 = vsel %vm232, %v204, 0
        %v333 = vsel %vm232, %v205, 0
        %v336 = vsel %vm232, %v206, 0
        %v339 = vsel %vm232, %v207, 0
        %341 = vmatprep.subr.mxu0 0.0
        %342 = vmatpush1.xpose.msra.mxu0 %v246
        %343 = vmatprep.subr.mxu0 0.0
        %344 = vmatpush1.xpose.msra.mxu0 %v249
        %345 = vmatprep.subr.mxu0 0.0
        %346 = vmatpush1.xpose.msra.mxu0 %v252
        %347 = vmatprep.subr.mxu0 0.0
        %348 = vmatpush1.xpose.msra.mxu0 %v255
        %349 = vmatprep.subr.mxu0 0.0
        %350 = vmatpush1.xpose.msra.mxu0 %v258
        %351 = vmatprep.subr.mxu0 0.0
        %352 = vmatpush1.xpose.msra.mxu0 %v261
        %353 = vmatprep.subr.mxu0 0.0
        %354 = vmatpush1.xpose.msra.mxu0 %v264
        %355 = vmatprep.subr.mxu0 0.0
        %356 = vmatpush1.xpose.msra.mxu0 %v267
        %357 = vmatprep.subr.mxu0 0.0
        %358 = vmatpush1.xpose.msra.mxu0 %v270
        %359 = vmatprep.subr.mxu0 0.0
        %360 = vmatpush1.xpose.msra.mxu0 %v273
        %361 = vmatprep.subr.mxu0 0.0
        %362 = vmatpush1.xpose.msra.mxu0 %v276
        %363 = vmatprep.subr.mxu0 0.0
        %364 = vmatpush1.xpose.msra.mxu0 %v279
        %365 = vmatprep.subr.mxu0 0.0
        %366 = vmatpush1.xpose.msra.mxu0 %v282
        %367 = vmatprep.subr.mxu0 0.0
        %368 = vmatpush1.xpose.msra.mxu0 %v285
        %369 = vmatprep.subr.mxu0 0.0
        %370 = vmatpush1.xpose.msra.mxu0 %v288
        %371 = vmatprep.subr.mxu0 0.0
        %372 = vmatpush1.xpose.msra.mxu0 %v291
        %373 = vmatprep.subr.mxu0 0.0
        %374 = vmatpush1.xpose.msra.mxu0 %v294
        %375 = vmatprep.subr.mxu0 0.0
        %376 = vmatpush1.xpose.msra.mxu0 %v297
        %377 = vmatprep.subr.mxu0 0.0
        %378 = vmatpush1.xpose.msra.mxu0 %v300
        %379 = vmatprep.subr.mxu0 0.0
        %380 = vmatpush1.xpose.msra.mxu0 %v303
        %381 = vmatprep.subr.mxu0 0.0
        %382 = vmatpush1.xpose.msra.mxu0 %v306
        %383 = vmatprep.subr.mxu0 0.0
        %384 = vmatpush1.xpose.msra.mxu0 %v309
        %385 = vmatprep.subr.mxu0 0.0
        %386 = vmatpush1.xpose.msra.mxu0 %v312
        %387 = vmatprep.subr.mxu0 0.0
        %388 = vmatpush1.xpose.msra.mxu0 %v315
        %389 = vmatprep.subr.mxu0 0.0
        %390 = vmatpush1.xpose.msra.mxu0 %v318
        %391 = vmatprep.subr.mxu0 0.0
        %392 = vmatpush1.xpose.msra.mxu0 %v321
        %393 = vmatprep.subr.mxu0 0.0
        %394 = vmatpush1.xpose.msra.mxu0 %v324
        %395 = vmatprep.subr.mxu0 0.0
        %396 = vmatpush1.xpose.msra.mxu0 %v327
        %397 = vmatprep.subr.mxu0 0.0
        %398 = vmatpush1.xpose.msra.mxu0 %v330
        %399 = vmatprep.subr.mxu0 0.0
        %400 = vmatpush1.xpose.msra.mxu0 %v333
        %401 = vmatprep.subr.mxu0 0.0
        %402 = vmatpush1.xpose.msra.mxu0 %v336
        %403 = vmatprep.subr.mxu0 0.0
        %404 = vmatpush1.xpose.msra.mxu0 %v339
        %405 = vmatprep.mubr.f32.mxu0 0.0
        %406 = vmatmul.mubr.f32.gmra.mrb[0].mxu0 %v234
        %v407 = vpop.f32.mrb[0].mxu0
        %v408 = vadd.f32 %v215, %v407
        %v409 = vpop.f32.mrb[0].mxu0
        %v410 = vadd.f32 %v215, %v409
        %411 = vmatprep.mubr.f32.mxu0 0.0
        %412 = vmatmul.mubr.f32.gmra.mrb[0].mxu0 %v237
        %v413 = vpop.f32.mrb[0].mxu0
        %v414 = vadd.f32 %v220, %v413
        %v415 = vpop.f32.mrb[0].mxu0
        %v416 = vadd.f32 %v220, %v415
        %417 = vmatprep.mubr.f32.mxu0 0.0
        %418 = vmatmul.mubr.f32.gmra.mrb[0].mxu0 %v240
        %v419 = vpop.f32.mrb[0].mxu0
        %v420 = vadd.f32 %v225, %v419
        %v421 = vpop.f32.mrb[0].mxu0
        %v422 = vadd.f32 %v225, %v421
        %423 = vmatprep.mubr.f32.mxu0 0.0
        %424 = vmatmul.mubr.f32.gmra.mrb[0].mxu0 %v243
        %v425 = vpop.f32.mrb[0].mxu0
        %v426 = vadd.f32 %v230, %v425
        %v427 = vpop.f32.mrb[0].mxu0
        %v428 = vadd.f32 %v230, %v427
        %429 = vdwg.mxu0
        %v430 = vmax.f32 %v408, 0.0
        %v431 = vmax.f32 %v410, 0.0
        %v432 = vmax.f32 %v414, 0.0
        %v433 = vmax.f32 %v416, 0.0
        %v434 = vmax.f32 %v420, 0.0
        %v435 = vmax.f32 %v422, 0.0
        %v436 = vmax.f32 %v426, 0.0
        %v437 = vmax.f32 %v428, 0.0
        %s438 = scalar_lea.vmem %s1, 32
        %v439 = vld [vmem:[%s438] sm:$0xff]
        %v440 = vld [vmem:[%s438 + $0x8] sm:$0xff]
        %s441 = scalar_lea.vmem %s2, 32
        %v442 = vld [vmem:[%s441] sm:$0xff]
        %v443 = vld [vmem:[%s441 + $0x8] sm:$0xff]
        %445 = vset.pattern.permute.xlu0 0
        %446 = vperm.xlu0 %445, %v442
        %v447 = vpop.permute.xlu0 %446
        %450 = vset.pattern.permute.xlu0 0
        %451 = vperm.xlu0 %450, %v443
        %v452 = vpop.permute.xlu0 %451
        %v455 = vsel %vm232, %v439, 0
        %v458 = vsel %vm232, %v440, 0
        %460 = vmatprep.subr.mxu0 %v431
        %461 = vmatpush1.msra.mxu0 %v430
        %462 = vmatprep.subr.mxu0 %v433
        %463 = vmatpush1.msra.mxu0 %v432
        %464 = vmatprep.subr.mxu0 %v435
        %465 = vmatpush1.msra.mxu0 %v434
        %466 = vmatprep.subr.mxu0 %v437
        %467 = vmatpush1.msra.mxu0 %v436
        %468 = vmatprep.subr.mxu0 0.0
        %469 = vmatpush1.msra.mxu0 0.0
        %470 = vmatprep.subr.mxu0 0.0
        %471 = vmatpush1.msra.mxu0 0.0
        %472 = vmatprep.subr.mxu0 0.0
        %473 = vmatpush1.msra.mxu0 0.0
        %474 = vmatprep.subr.mxu0 0.0
        %475 = vmatpush1.msra.mxu0 0.0
        %476 = vmatprep.subr.mxu0 0.0
        %477 = vmatpush1.msra.mxu0 0.0
        %478 = vmatprep.subr.mxu0 0.0
        %479 = vmatpush1.msra.mxu0 0.0
        %480 = vmatprep.subr.mxu0 0.0
        %481 = vmatpush1.msra.mxu0 0.0
        %482 = vmatprep.subr.mxu0 0.0
        %483 = vmatpush1.msra.mxu0 0.0
        %484 = vmatprep.subr.mxu0 0.0
        %485 = vmatpush1.msra.mxu0 0.0
        %486 = vmatprep.subr.mxu0 0.0
        %487 = vmatpush1.msra.mxu0 0.0
        %488 = vmatprep.subr.mxu0 0.0
        %489 = vmatpush1.msra.mxu0 0.0
        %490 = vmatprep.subr.mxu0 0.0
        %491 = vmatpush1.msra.mxu0 0.0
        %492 = vmatprep.subr.mxu0 0.0
        %493 = vmatpush1.msra.mxu0 0.0
        %494 = vmatprep.subr.mxu0 0.0
        %495 = vmatpush1.msra.mxu0 0.0
        %496 = vmatprep.subr.mxu0 0.0
        %497 = vmatpush1.msra.mxu0 0.0
        %498 = vmatprep.subr.mxu0 0.0
        %499 = vmatpush1.msra.mxu0 0.0
        %500 = vmatprep.subr.mxu0 0.0
        %501 = vmatpush1.msra.mxu0 0.0
        %502 = vmatprep.subr.mxu0 0.0
        %503 = vmatpush1.msra.mxu0 0.0
        %504 = vmatprep.subr.mxu0 0.0
        %505 = vmatpush1.msra.mxu0 0.0
        %506 = vmatprep.subr.mxu0 0.0
        %507 = vmatpush1.msra.mxu0 0.0
        %508 = vmatprep.subr.mxu0 0.0
        %509 = vmatpush1.msra.mxu0 0.0
        %510 = vmatprep.subr.mxu0 0.0
        %511 = vmatpush1.msra.mxu0 0.0
        %512 = vmatprep.subr.mxu0 0.0
        %513 = vmatpush1.msra.mxu0 0.0
        %514 = vmatprep.subr.mxu0 0.0
        %515 = vmatpush1.msra.mxu0 0.0
        %516 = vmatprep.subr.mxu0 0.0
        %517 = vmatpush1.msra.mxu0 0.0
        %518 = vmatprep.subr.mxu0 0.0
        %519 = vmatpush1.msra.mxu0 0.0
        %520 = vmatprep.subr.mxu0 0.0
        %521 = vmatpush1.msra.mxu0 0.0
        %522 = vmatprep.subr.mxu0 0.0
        %523 = vmatpush1.msra.mxu0 0.0
        %524 = vmatprep.mubr.f32.mxu0 0.0
        %525 = vmatmul.mubr.f32.gmra.mrb[0].mxu0 %v455
        %v526 = vpop.f32.mrb[0].mxu0
        %v527 = vadd.f32 %v447, %v526
        %v528 = vpop.f32.mrb[0].mxu0
        %v529 = vadd.f32 %v447, %v528
        %530 = vmatprep.mubr.f32.mxu0 0.0
        %531 = vmatmul.mubr.f32.gmra.mrb[0].mxu0 %v458
        %v532 = vpop.f32.mrb[0].mxu0
        %v533 = vadd.f32 %v452, %v532
        %v534 = vpop.f32.mrb[0].mxu0
        %v535 = vadd.f32 %v452, %v534
        %536 = vdwg.mxu0
        %v537 = vmax.f32 %v527, 0.0
        %v538 = vmax.f32 %v529, 0.0
        %v539 = vmax.f32 %v533, 0.0
        %v540 = vmax.f32 %v535, 0.0
        %s541 = scalar_lea.vmem %s1, 64
        %v542 = vld [vmem:[%s541] sm:$0xff]
        %v543 = vld [vmem:[%s541 + $0x8] sm:$0xff]
        %s544 = scalar_lea.vmem %s2, 64
        %v545 = vld [vmem:[%s544] sm:$0xff]
        %v546 = vld [vmem:[%s544 + $0x8] sm:$0xff]
        %548 = vset.pattern.permute.xlu0 0
        %549 = vperm.xlu0 %548, %v545
        %v550 = vpop.permute.xlu0 %549
        %553 = vset.pattern.permute.xlu0 0
        %554 = vperm.xlu0 %553, %v546
        %v555 = vpop.permute.xlu0 %554
        %vm557 = vcmask 130048
        %v559 = vsel %vm557, %v542, 0
        %v562 = vsel %vm557, %v543, 0
        %564 = vmatprep.subr.mxu0 %v538
        %565 = vmatpush1.msra.mxu0 %v537
        %566 = vmatprep.subr.mxu0 %v540
        %567 = vmatpush1.msra.mxu0 %v539
        %568 = vmatprep.subr.mxu0 0.0
        %569 = vmatpush1.msra.mxu0 0.0
        %570 = vmatprep.subr.mxu0 0.0
        %571 = vmatpush1.msra.mxu0 0.0
        %572 = vmatprep.subr.mxu0 0.0
        %573 = vmatpush1.msra.mxu0 0.0
        %574 = vmatprep.subr.mxu0 0.0
        %575 = vmatpush1.msra.mxu0 0.0
        %576 = vmatprep.subr.mxu0 0.0
        %577 = vmatpush1.msra.mxu0 0.0
        %578 = vmatprep.subr.mxu0 0.0
        %579 = vmatpush1.msra.mxu0 0.0
        %580 = vmatprep.subr.mxu0 0.0
        %581 = vmatpush1.msra.mxu0 0.0
        %582 = vmatprep.subr.mxu0 0.0
        %583 = vmatpush1.msra.mxu0 0.0
        %584 = vmatprep.subr.mxu0 0.0
        %585 = vmatpush1.msra.mxu0 0.0
        %586 = vmatprep.subr.mxu0 0.0
        %587 = vmatpush1.msra.mxu0 0.0
        %588 = vmatprep.subr.mxu0 0.0
        %589 = vmatpush1.msra.mxu0 0.0
        %590 = vmatprep.subr.mxu0 0.0
        %591 = vmatpush1.msra.mxu0 0.0
        %592 = vmatprep.subr.mxu0 0.0
        %593 = vmatpush1.msra.mxu0 0.0
        %594 = vmatprep.subr.mxu0 0.0
        %595 = vmatpush1.msra.mxu0 0.0
        %596 = vmatprep.subr.mxu0 0.0
        %597 = vmatpush1.msra.mxu0 0.0
        %598 = vmatprep.subr.mxu0 0.0
        %599 = vmatpush1.msra.mxu0 0.0
        %600 = vmatprep.subr.mxu0 0.0
        %601 = vmatpush1.msra.mxu0 0.0
        %602 = vmatprep.subr.mxu0 0.0
        %603 = vmatpush1.msra.mxu0 0.0
        %604 = vmatprep.subr.mxu0 0.0
        %605 = vmatpush1.msra.mxu0 0.0
        %606 = vmatprep.subr.mxu0 0.0
        %607 = vmatpush1.msra.mxu0 0.0
        %608 = vmatprep.subr.mxu0 0.0
        %609 = vmatpush1.msra.mxu0 0.0
        %610 = vmatprep.subr.mxu0 0.0
        %611 = vmatpush1.msra.mxu0 0.0
        %612 = vmatprep.subr.mxu0 0.0
        %613 = vmatpush1.msra.mxu0 0.0
        %614 = vmatprep.subr.mxu0 0.0
        %615 = vmatpush1.msra.mxu0 0.0
        %616 = vmatprep.subr.mxu0 0.0
        %617 = vmatpush1.msra.mxu0 0.0
        %618 = vmatprep.subr.mxu0 0.0
        %619 = vmatpush1.msra.mxu0 0.0
        %620 = vmatprep.subr.mxu0 0.0
        %621 = vmatpush1.msra.mxu0 0.0
        %622 = vmatprep.subr.mxu0 0.0
        %623 = vmatpush1.msra.mxu0 0.0
        %624 = vmatprep.subr.mxu0 0.0
        %625 = vmatpush1.msra.mxu0 0.0
        %626 = vmatprep.subr.mxu0 0.0
        %627 = vmatpush1.msra.mxu0 0.0
        %628 = vmatprep.mubr.f32.mxu0 0.0
        %629 = vmatmul.mubr.f32.gmra.mrb[0].mxu0 %v559
        %v630 = vpop.f32.mrb[0].mxu0
        %v631 = vadd.f32 %v550, %v630
        %v632 = vpop.f32.mrb[0].mxu0
        %v633 = vadd.f32 %v550, %v632
        %634 = vmatprep.mubr.f32.mxu0 0.0
        %635 = vmatmul.mubr.f32.gmra.mrb[0].mxu0 %v562
        %v636 = vpop.f32.mrb[0].mxu0
        %v637 = vadd.f32 %v555, %v636
        %v638 = vpop.f32.mrb[0].mxu0
        %v639 = vadd.f32 %v555, %v638
        %640 = vdwg.mxu0
        %v641 = vmax.f32 %v631, 0.0
        %v642 = vmax.f32 %v633, 0.0
        %v643 = vmax.f32 %v637, 0.0
        %v644 = vmax.f32 %v639, 0.0
        %s645 = scalar_lea.vmem %s1, 96
        %v646 = vld [vmem:[%s645] sm:$0xff]
        %v647 = vld [vmem:[%s645 + $0x8] sm:$0xff]
        %s648 = scalar_lea.vmem %s2, 96
        %v649 = vld [vmem:[%s648] sm:$0xff]
        %v650 = vld [vmem:[%s648 + $0x8] sm:$0xff]
        %652 = vset.pattern.permute.xlu0 0
        %653 = vperm.xlu0 %652, %v649
        %v654 = vpop.permute.xlu0 %653
        %657 = vset.pattern.permute.xlu0 0
        %658 = vperm.xlu0 %657, %v650
        %v659 = vpop.permute.xlu0 %658
        %v662 = vsel %vm557, %v646, 0
        %v665 = vsel %vm557, %v647, 0
        %667 = vmatprep.subr.mxu0 %v642
        %668 = vmatpush1.msra.mxu0 %v641
        %669 = vmatprep.subr.mxu0 %v644
        %670 = vmatpush1.msra.mxu0 %v643
        %671 = vmatprep.subr.mxu0 0.0
        %672 = vmatpush1.msra.mxu0 0.0
        %673 = vmatprep.subr.mxu0 0.0
        %674 = vmatpush1.msra.mxu0 0.0
        %675 = vmatprep.subr.mxu0 0.0
        %676 = vmatpush1.msra.mxu0 0.0
        %677 = vmatprep.subr.mxu0 0.0
        %678 = vmatpush1.msra.mxu0 0.0
        %679 = vmatprep.subr.mxu0 0.0
        %680 = vmatpush1.msra.mxu0 0.0
        %681 = vmatprep.subr.mxu0 0.0
        %682 = vmatpush1.msra.mxu0 0.0
        %683 = vmatprep.subr.mxu0 0.0
        %684 = vmatpush1.msra.mxu0 0.0
        %685 = vmatprep.subr.mxu0 0.0
        %686 = vmatpush1.msra.mxu0 0.0
        %687 = vmatprep.subr.mxu0 0.0
        %688 = vmatpush1.msra.mxu0 0.0
        %689 = vmatprep.subr.mxu0 0.0
        %690 = vmatpush1.msra.mxu0 0.0
        %691 = vmatprep.subr.mxu0 0.0
        %692 = vmatpush1.msra.mxu0 0.0
        %693 = vmatprep.subr.mxu0 0.0
        %694 = vmatpush1.msra.mxu0 0.0
        %695 = vmatprep.subr.mxu0 0.0
        %696 = vmatpush1.msra.mxu0 0.0
        %697 = vmatprep.subr.mxu0 0.0
        %698 = vmatpush1.msra.mxu0 0.0
        %699 = vmatprep.subr.mxu0 0.0
        %700 = vmatpush1.msra.mxu0 0.0
        %701 = vmatprep.subr.mxu0 0.0
        %702 = vmatpush1.msra.mxu0 0.0
        %703 = vmatprep.subr.mxu0 0.0
        %704 = vmatpush1.msra.mxu0 0.0
        %705 = vmatprep.subr.mxu0 0.0
        %706 = vmatpush1.msra.mxu0 0.0
        %707 = vmatprep.subr.mxu0 0.0
        %708 = vmatpush1.msra.mxu0 0.0
        %709 = vmatprep.subr.mxu0 0.0
        %710 = vmatpush1.msra.mxu0 0.0
        %711 = vmatprep.subr.mxu0 0.0
        %712 = vmatpush1.msra.mxu0 0.0
        %713 = vmatprep.subr.mxu0 0.0
        %714 = vmatpush1.msra.mxu0 0.0
        %715 = vmatprep.subr.mxu0 0.0
        %716 = vmatpush1.msra.mxu0 0.0
        %717 = vmatprep.subr.mxu0 0.0
        %718 = vmatpush1.msra.mxu0 0.0
        %719 = vmatprep.subr.mxu0 0.0
        %720 = vmatpush1.msra.mxu0 0.0
        %721 = vmatprep.subr.mxu0 0.0
        %722 = vmatpush1.msra.mxu0 0.0
        %723 = vmatprep.subr.mxu0 0.0
        %724 = vmatpush1.msra.mxu0 0.0
        %725 = vmatprep.subr.mxu0 0.0
        %726 = vmatpush1.msra.mxu0 0.0
        %727 = vmatprep.subr.mxu0 0.0
        %728 = vmatpush1.msra.mxu0 0.0
        %729 = vmatprep.subr.mxu0 0.0
        %730 = vmatpush1.msra.mxu0 0.0
        %731 = vmatprep.mubr.f32.mxu0 0.0
        %732 = vmatmul.mubr.f32.gmra.mrb[0].mxu0 %v662
        %v733 = vpop.f32.mrb[0].mxu0
        %v734 = vadd.f32 %v654, %v733
        %v735 = vpop.f32.mrb[0].mxu0
        %v736 = vadd.f32 %v654, %v735
        %737 = vmatprep.mubr.f32.mxu0 0.0
        %738 = vmatmul.mubr.f32.gmra.mrb[0].mxu0 %v665
        %v739 = vpop.f32.mrb[0].mxu0
        %v740 = vadd.f32 %v659, %v739
        %v741 = vpop.f32.mrb[0].mxu0
        %v742 = vadd.f32 %v659, %v741
        %743 = vdwg.mxu0
        %v744 = vmax.f32 %v734, 0.0
        %v745 = vmax.f32 %v736, 0.0
        %v746 = vmax.f32 %v740, 0.0
        %v747 = vmax.f32 %v742, 0.0
        %s748 = scalar_lea.vmem %s1, 128
        %v749 = vld [vmem:[%s748] sm:$0x1]
        %s750 = scalar_lea.vmem %s2, 128
        %v751 = vld [vmem:[%s750] sm:$0x1]
        %753 = vset.pattern.permute.xlu0 0
        %754 = vperm.xlu0 %753, %v751
        %v755 = vpop.permute.xlu0 %754
        %v758 = vsel %vm557, %v749, 0
        %760 = vmatprep.subr.mxu0 %v745
        %761 = vmatpush1.msra.mxu0 %v744
        %762 = vmatprep.subr.mxu0 %v747
        %763 = vmatpush1.msra.mxu0 %v746
        %764 = vmatprep.subr.mxu0 0.0
        %765 = vmatpush1.msra.mxu0 0.0
        %766 = vmatprep.subr.mxu0 0.0
        %767 = vmatpush1.msra.mxu0 0.0
        %768 = vmatprep.subr.mxu0 0.0
        %769 = vmatpush1.msra.mxu0 0.0
        %770 = vmatprep.subr.mxu0 0.0
        %771 = vmatpush1.msra.mxu0 0.0
        %772 = vmatprep.subr.mxu0 0.0
        %773 = vmatpush1.msra.mxu0 0.0
        %774 = vmatprep.subr.mxu0 0.0
        %775 = vmatpush1.msra.mxu0 0.0
        %776 = vmatprep.subr.mxu0 0.0
        %777 = vmatpush1.msra.mxu0 0.0
        %778 = vmatprep.subr.mxu0 0.0
        %779 = vmatpush1.msra.mxu0 0.0
        %780 = vmatprep.subr.mxu0 0.0
        %781 = vmatpush1.msra.mxu0 0.0
        %782 = vmatprep.subr.mxu0 0.0
        %783 = vmatpush1.msra.mxu0 0.0
        %784 = vmatprep.subr.mxu0 0.0
        %785 = vmatpush1.msra.mxu0 0.0
        %786 = vmatprep.subr.mxu0 0.0
        %787 = vmatpush1.msra.mxu0 0.0
        %788 = vmatprep.subr.mxu0 0.0
        %789 = vmatpush1.msra.mxu0 0.0
        %790 = vmatprep.subr.mxu0 0.0
        %791 = vmatpush1.msra.mxu0 0.0
        %792 = vmatprep.subr.mxu0 0.0
        %793 = vmatpush1.msra.mxu0 0.0
        %794 = vmatprep.subr.mxu0 0.0
        %795 = vmatpush1.msra.mxu0 0.0
        %796 = vmatprep.subr.mxu0 0.0
        %797 = vmatpush1.msra.mxu0 0.0
        %798 = vmatprep.subr.mxu0 0.0
        %799 = vmatpush1.msra.mxu0 0.0
        %800 = vmatprep.subr.mxu0 0.0
        %801 = vmatpush1.msra.mxu0 0.0
        %802 = vmatprep.subr.mxu0 0.0
        %803 = vmatpush1.msra.mxu0 0.0
        %804 = vmatprep.subr.mxu0 0.0
        %805 = vmatpush1.msra.mxu0 0.0
        %806 = vmatprep.subr.mxu0 0.0
        %807 = vmatpush1.msra.mxu0 0.0
        %808 = vmatprep.subr.mxu0 0.0
        %809 = vmatpush1.msra.mxu0 0.0
        %810 = vmatprep.subr.mxu0 0.0
        %811 = vmatpush1.msra.mxu0 0.0
        %812 = vmatprep.subr.mxu0 0.0
        %813 = vmatpush1.msra.mxu0 0.0
        %814 = vmatprep.subr.mxu0 0.0
        %815 = vmatpush1.msra.mxu0 0.0
        %816 = vmatprep.subr.mxu0 0.0
        %817 = vmatpush1.msra.mxu0 0.0
        %818 = vmatprep.subr.mxu0 0.0
        %819 = vmatpush1.msra.mxu0 0.0
        %820 = vmatprep.subr.mxu0 0.0
        %821 = vmatpush1.msra.mxu0 0.0
        %822 = vmatprep.subr.mxu0 0.0
        %823 = vmatpush1.msra.mxu0 0.0
        %824 = vmatprep.mubr.f32.mxu0 0.0
        %825 = vmatmul.mubr.f32.gmra.mrb[0].mxu0 %v758
        %v826 = vpop.f32.mrb[0].mxu0
        %v827 = vadd.f32 %v755, %v826
        %v828 = vpop.f32.mrb[0].mxu0
        %v829 = vadd.f32 %v755, %v828
        %830 = vdwg.mxu0
        %v833 = vcombine.low %v827, %v829
        %v835 = vunpack.c.l.s4 1966171168
        %v836 = vunpack.c.0.s8 %v835
        %v837 = vlaneseq
        %v838 = vshrl.u32 %v837, 7
        %v839 = vsub.s32 %v836, %v838
        %v840 = vrot.slane %v833, %v839
        %v842 = vunpack.c.l.s4 1966171168
        %v843 = vunpack.c.0.s8 %v842
        %v844 = vlaneseq
        %v845 = vshrl.u32 %v844, 7
        %v846 = vsub.s32 %v843, %v845
        %v847 = vrot.slane %v840, %v846
        %v849 = vlaneseq
        %vm850 = vcmp.ge.s32.totalorder %v849, 0
        %vm851 = vcmp.lt.s32.totalorder %v849, 256
        %vm852 = vmand %vm850, %vm851
        %853 = vst.msk [vmem:[%s164] sm:$0x3] %vm852, %v847
        %s854 = sand.u32 %s93, 1
        %s855 = scalar_lea.sflag [#allocation3], %s854
        %s856 = sand.u32 %s93, 1
        %s857 = smul.addr %s856, 2
        %s858 = scalar_lea.vmem [#allocation2], %s857
        // Predicated region
        $region33: #{tpu_custom_call.1} parent=31 // pred_check
          %p859 = pneg %p103
        $region34: #{tpu_custom_call.1} parent=31 // pred_check_branch
          %861 = sbr.rel (%p859) target = $region36
        $region35: #{tpu_custom_call.1} parent=31 // pred_region
          %s862 = smul.u32 2, %s17
          %s864 = ssub.s32 32, 32
          %865 = vsyncadd %s855, %s864
          %s866 = smul.addr %s862, 16
          %s867 = scalar_lea.hbm %s3, %s866
          %s869 = sshll.u32 %s858, 4
          %s870 = int_to_ptr.vmem [resolvable:$true] %s869
          %872 = dma.vmem_to_hbm [thread:$0]  %s870, 32, %s867, %s855
        $region36: #{tpu_custom_call.1} parent=31 // pred_fallthru
          _
      $region32: #{tpu_custom_call.1} parent=5 // pred_fallthru
        _
      %p873 = scmp.le.s32.totalorder 2, %s12
      // Predicated region
      $region37: #{tpu_custom_call.1} parent=5 // pred_check
        %p874 = pneg %p873
      $region38: #{tpu_custom_call.1} parent=5 // pred_check_branch
        %876 = sbr.rel (%p874) target = $region40
      $region39: #{tpu_custom_call.1} parent=5 // pred_region
        %s877 = ssub.s32 %s12, 2
        // Predicated region
        $region41: #{tpu_custom_call.1} parent=39 // pred_check
          %p878 = pneg %p109
        $region42: #{tpu_custom_call.1} parent=39 // pred_check_branch
          %880 = sbr.rel (%p878) target = $region44
        $region43: #{tpu_custom_call.1} parent=39 // pred_region
          %s881 = sand.u32 %s94, 1
          %s882 = scalar_lea.sflag [#allocation3], %s881
          %s883 = sand.u32 %s94, 1
          %s884 = smul.addr %s883, 2
          %s885 = scalar_lea.vmem [#allocation2], %s884
          %886 = dma.done %s882, 32
        $region44: #{tpu_custom_call.1} parent=39 // pred_fallthru
          _
      $region40: #{tpu_custom_call.1} parent=5 // pred_fallthru
        _
    $region6: #{tpu_custom_call.1} parent=1 // loop_footer
      %s16 = sadd.s32 1, %s12
    $region7: #{tpu_custom_call.1} parent=1 // loop_footer_branch
      %11 = sbr.rel target = $region3
    $region8: #{tpu_custom_call.1} parent=1 // loop_exit
      _
    %887 = vsyncpa [#allocation3], 1
    %s888 = scalar_lea.sflag [#allocation3], 1
    %889 = vsyncpa %s888, 1

</llo_original>
